<compile_context>
chip_gen: v7x
topology: tpu7x:2x2x1
jax: 0.10.0
libtpu: 0.0.40
codegen_flags: <defaults>
</compile_context>

<pallas_src>
import math

import jax
import jax.numpy as jnp
from jax.experimental import pallas as pl
from jax.experimental.pallas import tpu as pltpu

TWO_PI = 2.0 * math.pi
LANES = 128


def _grid_cell_kernel(params_ref, x_ref, o_ref):
    """params_ref: SMEM f32[11] = [A0,A1,A2, B0,B1,B2, C0,C1,C2, k0,k1]
       x_ref     : VMEM (2, tile_rows, 128) planar point coordinates (x0, x1)
       o_ref     : VMEM (tile_rows, 128) tile of rates."""
    x0 = x_ref[0]
    x1 = x_ref[1]

    # 3 grid axes, statically unrolled: 2 FMAs + 1 cos per point per axis.
    acc = jnp.cos(x0 * params_ref[0] + x1 * params_ref[3] + params_ref[6])
    acc = acc + jnp.cos(x0 * params_ref[1] + x1 * params_ref[4] + params_ref[7])
    acc = acc + jnp.cos(x0 * params_ref[2] + x1 * params_ref[5] + params_ref[8])

    # (acc + 1.5) / 4.5 * peak  ==  acc * (peak/4.5) + peak/3
    o_ref[...] = acc * params_ref[9] + params_ref[10]


def grid_cell_forward(X, period, orientation, peak_rate, offset,
                      *, block_points=262144, return_padded=False):
    """X: (N, 2) float32 point coordinates.

    `orientation` must be the effective angles (ori * ori_scalling in the
    torch module).  Returns rate of shape (N, 1) (matching the torch module),
    or the padded (n_rows, 128) slab if `return_padded=True` so a downstream
    consumer can fuse/skip the final slice.
    """
    X = jnp.asarray(X, jnp.float32)
    N = X.shape[0]

    # ---- choose a sublane-dense tiling: points -> (n_rows, 128) ------------
    rows_needed = pl.cdiv(N, LANES)                      # rows of 128 points
    desired_rows = max(8, (block_points // LANES) // 8 * 8)

    if rows_needed >= 16:
        # Ensure at least 2 grid steps so v7x's 2 TensorCores both get work.
        half_rows = pl.cdiv(pl.cdiv(rows_needed, 2), 8) * 8
        tile_rows = min(desired_rows, half_rows)
    else:
        tile_rows = max(8, pl.cdiv(rows_needed, 8) * 8)  # single small tile
    tile_rows = max(8, (tile_rows // 8) * 8)

    n_rows = pl.cdiv(rows_needed, tile_rows) * tile_rows
    n_pad = n_rows * LANES
    grid_steps = n_rows // tile_rows

    # ---- single pad + transpose + reshape into planar (2, n_rows, 128) -----
    Xp = jnp.pad(X, ((0, n_pad - N), (0, 0)))            # (n_pad, 2)
    x_planar = Xp.T.reshape(2, n_rows, LANES)            # (2, n_rows, 128)

    # ---- hoist all point-independent math into 11 scalar coefficients ------
    # torch: ori = orientation/0.01 (Parameter), sori = ori*0.01 == orientation
    sori = jnp.asarray(orientation, jnp.float32).reshape(3)
    per = jnp.asarray(period, jnp.float32).reshape(3)
    off = jnp.asarray(offset, jnp.float32).reshape(2)
    peak = jnp.asarray(peak_rate, jnp.float32).reshape(())

    cs = jnp.cos(sori)
    sn = jnp.sin(sori)
    w = TWO_PI / per                                     # 2*pi / period_j
    A = cs * w                                           # coeff of x0
    B = sn * w                                           # coeff of x1
    C = -(off[0] * cs + off[1] * sn) * w                 # -offset phase
    k0 = peak / 4.5
    k1 = peak / 3.0

    params = jnp.concatenate(
        [A, B, C, k0.reshape(1), k1.reshape(1)]).astype(jnp.float32)   # (11,)

    cost = pl.CostEstimate(
        flops=int(8 * n_pad),               # 2 FMAs/axis * 3 axes + epilogue
        transcendentals=int(3 * n_pad),     # 3 cos per point
        bytes_accessed=int(12 * n_pad),     # 8 B in (x0,x1) + 4 B out, f32
    )

    out = pl.pallas_call(
        _grid_cell_kernel,
        out_shape=jax.ShapeDtypeStruct((n_rows, LANES), jnp.float32),
        grid_spec=pltpu.PrefetchScalarGridSpec(
            num_scalar_prefetch=1,
            grid=(grid_steps,),
            in_specs=[
                pl.BlockSpec((2, tile_rows, LANES), lambda i, p: (0, i, 0)),
            ],
            out_specs=pl.BlockSpec((tile_rows, LANES), lambda i, p: (i, 0)),
        ),
        compiler_params=pltpu.CompilerParams(
            dimension_semantics=("parallel",)),
        cost_estimate=cost,
    )(params, x_planar)

    if return_padded:
        return out                                        # (n_rows, 128)
    return out.reshape(n_pad)[:N].reshape(N, 1)


# ---------------------------------------------------------------------------
# pure-JAX reference (literal translation of the torch forward) for checking
# ---------------------------------------------------------------------------
def _length_to_angle(x, period):
    xr = x / period * math.pi * 2.0
    return jnp.arctan2(jnp.sin(xr), jnp.cos(xr))


def grid_cell_ref(X, period, orientation, peak_rate, offset):
    X = jnp.asarray(X, jnp.float32)
    myMatCos = jnp.array([[1.0], [0.0]], jnp.float32)
    myMatSin = jnp.array([[0.0], [1.0]], jnp.float32)
    sori = jnp.asarray(orientation, jnp.float32)          # ori * ori_scalling
    per = jnp.asarray(period, jnp.float32)
    off = jnp.asarray(offset, jnp.float32)
    total = jnp.zeros((X.shape[0], 1), jnp.float32)
    for j in range(3):
        Rx = (myMatCos @ jnp.cos(-sori[j]).reshape(1, 1)
              + myMatSin @ (-jnp.sin(-sori[j])).reshape(1, 1))        # (2,1)
        d = X @ Rx                                                    # (N,1)
        c = _length_to_angle(d, per[j])
        doff = off @ Rx                                               # (1,)
        a = _length_to_angle(doff, per[j])
        total = total + jnp.cos(c - a)
    return (total + 1.5) / 4.5 * jnp.asarray(peak_rate, jnp.float32)


if __name__ == "__main__":
    key = jax.random.PRNGKey(0)

    period = jnp.array([30.0, 35.0, 40.0], jnp.float32)       # 3 periods
    orientation = jnp.array([0.10, 0.62, 1.15], jnp.float32)  # 3 orientations (rad)
    peak_rate = jnp.float32(5.0)                               # 1 peak rate
    offset = jnp.array([10.0, 20.0], jnp.float32)              # 2-D offset

    # N values exercising: exact multiple of 128, ragged padding, and a size
    # large enough (rows >= 16) to produce >= 2 grid steps (dual-TC path).
    for N in (256, 300, 4100):
        k = jax.random.fold_in(key, N)
        X = jax.random.uniform(k, (N, 2), jnp.float32, minval=0.0, maxval=100.0)

        rate = grid_cell_forward(X, period, orientation, peak_rate, offset)
        rate = jax.block_until_ready(rate)

        ref = grid_cell_ref(X, period, orientation, peak_rate, offset)
        assert rate.shape == (N, 1), rate.shape
        err = float(jnp.max(jnp.abs(rate - ref)))
        assert jnp.allclose(rate, ref, atol=1e-4, rtol=1e-4), err

    print("KERNEL_OK")
</pallas_src>

<mosaic_0001>
module attributes {stable_mosaic.version = 11 : i64} {
  func.func @_grid_cell_kernel(%arg0: i32, %arg1: memref<11xf32, #tpu.memory_space<smem>>, %arg2: memref<2x8x128xf32, #tpu.memory_space<vmem>>, %arg3: memref<8x128xf32, #tpu.memory_space<vmem>>) attributes {dimension_semantics = [#tpu.dimension_semantics<parallel>], iteration_bounds = array<i64: 1>, scalar_prefetch = 1 : i64, scratch_operands = 0 : i64, tpu.core_type = #tpu.core_type<tc>, window_params = [{transform_indices = @transform_0, window_bounds = array<i64: 2, 8, 128>}, {transform_indices = @transform_1, window_bounds = array<i64: 8, 128>}]} {
    %c0 = arith.constant 0 : index
    %c0_0 = arith.constant 0 : index
    %c0_1 = arith.constant 0 : index
    %0 = vector.load %arg2[%c0, %c0_0, %c0_1] : memref<2x8x128xf32, #tpu.memory_space<vmem>>, vector<1x8x128xf32>
    %1 = vector.shape_cast %0 : vector<1x8x128xf32> to vector<8x128xf32>
    %c1 = arith.constant 1 : index
    %c0_2 = arith.constant 0 : index
    %c0_3 = arith.constant 0 : index
    %2 = vector.load %arg2[%c1, %c0_2, %c0_3] : memref<2x8x128xf32, #tpu.memory_space<vmem>>, vector<1x8x128xf32>
    %3 = vector.shape_cast %2 : vector<1x8x128xf32> to vector<8x128xf32>
    %c0_4 = arith.constant 0 : index
    %4 = memref.load %arg1[%c0_4] : memref<11xf32, #tpu.memory_space<smem>>
    %5 = vector.broadcast %4 : f32 to vector<8x128xf32>
    %6 = arith.mulf %1, %5 : vector<8x128xf32>
    %c3 = arith.constant 3 : index
    %7 = memref.load %arg1[%c3] : memref<11xf32, #tpu.memory_space<smem>>
    %8 = vector.broadcast %7 : f32 to vector<8x128xf32>
    %9 = arith.mulf %3, %8 : vector<8x128xf32>
    %10 = arith.addf %6, %9 : vector<8x128xf32>
    %c6 = arith.constant 6 : index
    %11 = memref.load %arg1[%c6] : memref<11xf32, #tpu.memory_space<smem>>
    %12 = vector.broadcast %11 : f32 to vector<8x128xf32>
    %13 = arith.addf %10, %12 : vector<8x128xf32>
    %14 = math.cos %13 : vector<8x128xf32>
    %c1_5 = arith.constant 1 : index
    %15 = memref.load %arg1[%c1_5] : memref<11xf32, #tpu.memory_space<smem>>
    %16 = vector.broadcast %15 : f32 to vector<8x128xf32>
    %17 = arith.mulf %1, %16 : vector<8x128xf32>
    %c4 = arith.constant 4 : index
    %18 = memref.load %arg1[%c4] : memref<11xf32, #tpu.memory_space<smem>>
    %19 = vector.broadcast %18 : f32 to vector<8x128xf32>
    %20 = arith.mulf %3, %19 : vector<8x128xf32>
    %21 = arith.addf %17, %20 : vector<8x128xf32>
    %c7 = arith.constant 7 : index
    %22 = memref.load %arg1[%c7] : memref<11xf32, #tpu.memory_space<smem>>
    %23 = vector.broadcast %22 : f32 to vector<8x128xf32>
    %24 = arith.addf %21, %23 : vector<8x128xf32>
    %25 = math.cos %24 : vector<8x128xf32>
    %26 = arith.addf %14, %25 : vector<8x128xf32>
    %c2 = arith.constant 2 : index
    %27 = memref.load %arg1[%c2] : memref<11xf32, #tpu.memory_space<smem>>
    %28 = vector.broadcast %27 : f32 to vector<8x128xf32>
    %29 = arith.mulf %1, %28 : vector<8x128xf32>
    %c5 = arith.constant 5 : index
    %30 = memref.load %arg1[%c5] : memref<11xf32, #tpu.memory_space<smem>>
    %31 = vector.broadcast %30 : f32 to vector<8x128xf32>
    %32 = arith.mulf %3, %31 : vector<8x128xf32>
    %33 = arith.addf %29, %32 : vector<8x128xf32>
    %c8 = arith.constant 8 : index
    %34 = memref.load %arg1[%c8] : memref<11xf32, #tpu.memory_space<smem>>
    %35 = vector.broadcast %34 : f32 to vector<8x128xf32>
    %36 = arith.addf %33, %35 : vector<8x128xf32>
    %37 = math.cos %36 : vector<8x128xf32>
    %38 = arith.addf %26, %37 : vector<8x128xf32>
    %c9 = arith.constant 9 : index
    %39 = memref.load %arg1[%c9] : memref<11xf32, #tpu.memory_space<smem>>
    %40 = vector.broadcast %39 : f32 to vector<8x128xf32>
    %41 = arith.mulf %38, %40 : vector<8x128xf32>
    %c10 = arith.constant 10 : index
    %42 = memref.load %arg1[%c10] : memref<11xf32, #tpu.memory_space<smem>>
    %43 = vector.broadcast %42 : f32 to vector<8x128xf32>
    %44 = arith.addf %41, %43 : vector<8x128xf32>
    %c0_6 = arith.constant 0 : index
    %c0_7 = arith.constant 0 : index
    %45 = vector.load %arg3[%c0_6, %c0_7] : memref<8x128xf32, #tpu.memory_space<vmem>>, vector<8x128xf32>
    tpu.vector_store %arg3[%c0_6, %c0_7], %44 {strides = array<i32>} : memref<8x128xf32, #tpu.memory_space<vmem>>, vector<8x128xf32>,
    return
  }
  func.func @transform_0(%arg0: i32, %arg1: memref<11xf32, #tpu.memory_space<smem>>) -> (i32, i32, i32) {
    %c0_i32 = arith.constant 0 : i32
    %c0_i32_0 = arith.constant 0 : i32
    %c0_i32_1 = arith.constant 0 : i32
    return %c0_i32, %arg0, %c0_i32_0 : i32, i32, i32
  }
  func.func @transform_1(%arg0: i32, %arg1: memref<11xf32, #tpu.memory_space<smem>>) -> (i32, i32) {
    %c0_i32 = arith.constant 0 : i32
    %c0_i32_0 = arith.constant 0 : i32
    return %arg0, %c0_i32 : i32, i32
  }
}

</mosaic_0001>

<llo_original>
// kernel: tpu_custom_call.1
$region0: #{tpu_custom_call.1}
  #allocation0 [shape = 'u32[]', space=smem, size = 0x4, offset = 0x4, fixed_abs, tag = 'smem constant byte address 0x4 - core index']
  #allocation1 [shape = 'u32[144,128]{1,0:T(1,128)}', space=vmem, size = 0x12000, scoped, tag = 'internal scratch']
  #allocation2 [shape = 's32[1]{0}', space=sflag, size = 0x4, scoped, tag = 'scoped memory for tpu_custom_call.1']
  #allocation3 [shape = 'u8[512]{0}', space=smem, size = 0x200, scoped, tag = 'prefetched SMEM operand 0']
  %s0 = inlined_call_operand.hbm [shape: f32[11], index: 0, kind: input, shape index: {}]
  %s1 = inlined_call_operand.hbm [shape: f32[2,8,128], index: 1, kind: input, shape index: {}]
  %s2 = inlined_call_operand.hbm [shape: f32[8,128], index: 2, kind: output, shape index: {}]
  %s3 = sld [smem:[#allocation0]]
  $region18: #{tpu_custom_call.1} parent=0
    _
  %s5 = ssub.s32 1, %s3
  %s6 = scalar_select 0, %s5, %s3
  %8 = dma.hbm_to_smem %s0, 16, [#allocation3], [#allocation2]
  %9 = dma.done [#allocation2], 16
  %10 = sfence
  $region1: #{tpu_custom_call.1} parent=0
    #allocation4 [shape = 'u8[8192]{0}', space=vmem, size = 0x2000, scoped, tag = 'input window, operand 1, single buffered']
    #allocation5 [shape = 's32[1]{0}', space=sflag, size = 0x4, scoped, tag = 'scoped memory for tpu_custom_call.1']
    #allocation6 [shape = 's32[1]{0}', space=sflag, size = 0x4, scoped, tag = 'scoped memory for tpu_custom_call.1']
    #allocation7 [shape = 'u8[4096]{0}', space=vmem, size = 0x1000, scoped, tag = 'output window, operand 0, single buffered']
    %11 = vsyncpa [#allocation5], 0
    %12 = vsyncpa [#allocation6], 0
    // Predicated region
    $region2: #{tpu_custom_call.1} parent=1 // pred_check
      _
    $region3: #{tpu_custom_call.1} parent=1 // pred_check_branch
      %14 = sbr.rel (0) target = $region5
    $region4: #{tpu_custom_call.1} parent=1 // pred_region
      %s16 = ssub.s32 256, 256
      %17 = vsyncadd [#allocation5], %s16
      %s18 = sshll.u32 [#allocation4], 4
      %s19 = int_to_ptr.vmem [resolvable:$true] %s18
      %24 = dma.hbm_to_vmem [thread:$0]  %s1, 256, %s19, [#allocation5], 128, 128, 8
    $region5: #{tpu_custom_call.1} parent=1 // pred_fallthru
      _
    // Predicated region
    $region6: #{tpu_custom_call.1} parent=1 // pred_check
      _
    $region7: #{tpu_custom_call.1} parent=1 // pred_check_branch
      %26 = sbr.rel (0) target = $region9
    $region8: #{tpu_custom_call.1} parent=1 // pred_region
      %27 = dma.done [#allocation5], 256
    $region9: #{tpu_custom_call.1} parent=1 // pred_fallthru
      _
    %v28 = vld [vmem:[#allocation4] sm:$0xff]
    %s29 = scalar_lea.vmem [#allocation4], 8
    %v30 = vld [vmem:[%s29] sm:$0xff]
    %s31 = sld [smem:[#allocation3]]
    %v32 = vstv %s31
    %v33 = vmul.f32 %v28, %v32
    %s34 = sld [smem:[#allocation3 + $0x3]]
    %v35 = vstv %s34
    %v36 = vmul.f32 %v30, %v35
    %v37 = vadd.f32 %v33, %v36
    %s38 = sld [smem:[#allocation3 + $0x6]]
    %v39 = vstv %s38
    %v40 = vadd.f32 %v37, %v39
    %v41 = vand.u32 2147483647, %v40
    %vm42 = vcmp.le.f32.partialorder %v41, 0.7853982
    %vm43 = vcmp.lt.s32.totalorder %v40, 0
    %v44 = vand.u32 %v40, 2139095040
    %v45 = vshrl.u32 %v44, 23
    %v46 = vsub.s32 %v45, 127
    %v47 = vand.u32 2147483647, %v40
    %v48 = vand.u32 %v47, 8388607
    %v49 = vor.u32 %v48, 8388608
    %v50 = vsub.s32 0, %v49
    %v51 = vadd.s32 %v46, 1
    %vm52 = vcmp.gt.s32.totalorder %v51, 0
    %v53 = vsel %vm52, %v51, 0
    %v54 = vshrl.u32 %v53, 5
    %v55 = vand.u32 %v53, 31
    %v56 = vsub.s32 32, %v55
    %v57 = vshrl.u32 683565275, %v56
    %v58 = vshll.u32 683565275, %v55
    %v59 = vshrl.u32 2475754826, %v56
    %v60 = vor.u32 %v58, %v59
    %v61 = vshll.u32 2475754826, %v55
    %v62 = vshrl.u32 2131351028, %v56
    %v63 = vor.u32 %v61, %v62
    %v64 = vshll.u32 2131351028, %v55
    %v65 = vshrl.u32 2102212464, %v56
    %v66 = vor.u32 %v64, %v65
    %v67 = vshll.u32 2102212464, %v55
    %v68 = vshrl.u32 920167782, %v56
    %v69 = vor.u32 %v67, %v68
    %v70 = vshll.u32 920167782, %v55
    %v71 = vshrl.u32 1326507024, %v56
    %v72 = vor.u32 %v70, %v71
    %vm73 = vcmp.lt.s32.totalorder %v54, 1
    %vm74 = vcmp.lt.s32.totalorder %v54, 2
    %vm75 = vcmp.lt.s32.totalorder %v54, 3
    %vm76 = vcmp.lt.s32.totalorder %v54, 4
    %v77 = vsel %vm73, %v57, %v60
    %v78 = vsel %vm76, %v66, 2102212464
    %v79 = vsel %vm75, %v63, %v78
    %v80 = vsel %vm74, %v77, %v79
    %v81 = vsel %vm73, %v60, %v63
    %v82 = vsel %vm76, %v69, 920167782
    %v83 = vsel %vm75, %v66, %v82
    %v84 = vsel %vm74, %v81, %v83
    %v85 = vsel %vm73, %v63, %v66
    %v86 = vsel %vm76, %v72, 1326507024
    %v87 = vsel %vm75, %v69, %v86
    %v88 = vsel %vm74, %v85, %v87
    %v89 = vshll.u32 %v49, 8
    %v90 = vmul.u32.u64.compose %v89, %v88
    %v91 = vextract.low.u32 %v90
    %v92 = vextract.high.u32 %v90
    %v93 = vmul.u32.u64.compose %v89, %v84
    %v94 = vextract.low.u32 %v93
    %v95 = vextract.high.u32 %v93
    %v96 = vmul.u32 %v89, %v80
    %v97 = vadd.s32 %v92, %v94
    %vm98 = vc.u32 %v92, %v94
    %v99 = vadd.s32 %v95, 1
    %v100 = vsel %vm98, %v99, %v95
    %v101 = vadd.s32 %v96, %v100
    %v102 = vadd.s32 %v101, 536870912
    %v103 = vshrl.u32 %v102, 30
    %v104 = vshll.u32 %v103, 30
    %v105 = vsub.s32 %v101, %v104
    %vm106 = vcmp.lt.s32.totalorder %v105, 0
    %v107 = vsub.s32 0, %v105
    %v108 = vsel %vm106, %v107, %v105
    %v109 = vclz %v108
    %v110 = vsub.s32 %v109, 2
    %vm111 = vcmp.gt.s32.totalorder 0, %v110
    %v112 = vsel %vm111, 0, %v110
    %v113 = vsub.s32 32, %v112
    %v114 = vshll.u32 %v105, %v112
    %v115 = vshrl.u32 %v97, %v113
    %v116 = vor.u32 %v114, %v115
    %v117 = vsub.s32 4294967266, %v112
    %v118 = vadd.s32 %v117, 127
    %v119 = vshll.u32 %v118, 23
    %v120 = vor.u32 4788187, %v119
    %v121 = vand.u32 2147483647, %v120
    %v123 = vcvt.s32.f32 %v116
    %v124 = vmul.f32 %v123, %v121
    %v125 = vxor.u32 %v124, 2147483648
    %v126 = vsel %vm43, %v125, %v124
    %v127 = vsub.s32 4, %v103
    %v128 = vsel %vm43, %v127, %v103
    %v129 = vsel %vm42, %v40, %v126
    %v130 = vsel %vm42, 0, %v128
    %v131 = vcosq.f32.pop %v129
    %v132 = vsinq.f32.pop %v129
    %vm133 = vweird.f32 %v40
    %v134 = vand.u32 %v130, 3
    %vm135 = vcmp.lt.s32.totalorder %v134, 2
    %vm136 = vcmp.eq.s32.totalorder %v134, 0
    %v137 = vxor.u32 %v132, 2147483648
    %v138 = vsel %vm136, %v131, %v137
    %vm139 = vcmp.eq.s32.totalorder %v134, 2
    %v140 = vxor.u32 %v131, 2147483648
    %v141 = vsel %vm139, %v140, %v132
    %v142 = vsel %vm135, %v138, %v141
    %v143 = vsel %vm133, nan, %v142
    %s144 = sld [smem:[#allocation3 + $0x1]]
    %v145 = vstv %s144
    %v146 = vmul.f32 %v28, %v145
    %s147 = sld [smem:[#allocation3 + $0x4]]
    %v148 = vstv %s147
    %v149 = vmul.f32 %v30, %v148
    %v150 = vadd.f32 %v146, %v149
    %s151 = sld [smem:[#allocation3 + $0x7]]
    %v152 = vstv %s151
    %v153 = vadd.f32 %v150, %v152
    %v154 = vand.u32 2147483647, %v153
    %vm155 = vcmp.le.f32.partialorder %v154, 0.7853982
    %vm156 = vcmp.lt.s32.totalorder %v153, 0
    %v157 = vand.u32 %v153, 2139095040
    %v158 = vshrl.u32 %v157, 23
    %v159 = vsub.s32 %v158, 127
    %v160 = vand.u32 2147483647, %v153
    %v161 = vand.u32 %v160, 8388607
    %v162 = vor.u32 %v161, 8388608
    %v163 = vsub.s32 0, %v162
    %v164 = vadd.s32 %v159, 1
    %vm165 = vcmp.gt.s32.totalorder %v164, 0
    %v166 = vsel %vm165, %v164, 0
    %v167 = vshrl.u32 %v166, 5
    %v168 = vand.u32 %v166, 31
    %v169 = vsub.s32 32, %v168
    %v170 = vshrl.u32 683565275, %v169
    %v171 = vshll.u32 683565275, %v168
    %v172 = vshrl.u32 2475754826, %v169
    %v173 = vor.u32 %v171, %v172
    %v174 = vshll.u32 2475754826, %v168
    %v175 = vshrl.u32 2131351028, %v169
    %v176 = vor.u32 %v174, %v175
    %v177 = vshll.u32 2131351028, %v168
    %v178 = vshrl.u32 2102212464, %v169
    %v179 = vor.u32 %v177, %v178
    %v180 = vshll.u32 2102212464, %v168
    %v181 = vshrl.u32 920167782, %v169
    %v182 = vor.u32 %v180, %v181
    %v183 = vshll.u32 920167782, %v168
    %v184 = vshrl.u32 1326507024, %v169
    %v185 = vor.u32 %v183, %v184
    %vm186 = vcmp.lt.s32.totalorder %v167, 1
    %vm187 = vcmp.lt.s32.totalorder %v167, 2
    %vm188 = vcmp.lt.s32.totalorder %v167, 3
    %vm189 = vcmp.lt.s32.totalorder %v167, 4
    %v190 = vsel %vm186, %v170, %v173
    %v191 = vsel %vm189, %v179, 2102212464
    %v192 = vsel %vm188, %v176, %v191
    %v193 = vsel %vm187, %v190, %v192
    %v194 = vsel %vm186, %v173, %v176
    %v195 = vsel %vm189, %v182, 920167782
    %v196 = vsel %vm188, %v179, %v195
    %v197 = vsel %vm187, %v194, %v196
    %v198 = vsel %vm186, %v176, %v179
    %v199 = vsel %vm189, %v185, 1326507024
    %v200 = vsel %vm188, %v182, %v199
    %v201 = vsel %vm187, %v198, %v200
    %v202 = vshll.u32 %v162, 8
    %v203 = vmul.u32.u64.compose %v202, %v201
    %v204 = vextract.low.u32 %v203
    %v205 = vextract.high.u32 %v203
    %v206 = vmul.u32.u64.compose %v202, %v197
    %v207 = vextract.low.u32 %v206
    %v208 = vextract.high.u32 %v206
    %v209 = vmul.u32 %v202, %v193
    %v210 = vadd.s32 %v205, %v207
    %vm211 = vc.u32 %v205, %v207
    %v212 = vadd.s32 %v208, 1
    %v213 = vsel %vm211, %v212, %v208
    %v214 = vadd.s32 %v209, %v213
    %v215 = vadd.s32 %v214, 536870912
    %v216 = vshrl.u32 %v215, 30
    %v217 = vshll.u32 %v216, 30
    %v218 = vsub.s32 %v214, %v217
    %vm219 = vcmp.lt.s32.totalorder %v218, 0
    %v220 = vsub.s32 0, %v218
    %v221 = vsel %vm219, %v220, %v218
    %v222 = vclz %v221
    %v223 = vsub.s32 %v222, 2
    %vm224 = vcmp.gt.s32.totalorder 0, %v223
    %v225 = vsel %vm224, 0, %v223
    %v226 = vsub.s32 32, %v225
    %v227 = vshll.u32 %v218, %v225
    %v228 = vshrl.u32 %v210, %v226
    %v229 = vor.u32 %v227, %v228
    %v230 = vsub.s32 4294967266, %v225
    %v231 = vadd.s32 %v230, 127
    %v232 = vshll.u32 %v231, 23
    %v233 = vor.u32 4788187, %v232
    %v234 = vand.u32 2147483647, %v233
    %v236 = vcvt.s32.f32 %v229
    %v237 = vmul.f32 %v236, %v234
    %v238 = vxor.u32 %v237, 2147483648
    %v239 = vsel %vm156, %v238, %v237
    %v240 = vsub.s32 4, %v216
    %v241 = vsel %vm156, %v240, %v216
    %v242 = vsel %vm155, %v153, %v239
    %v243 = vsel %vm155, 0, %v241
    %v244 = vcosq.f32.pop %v242
    %v245 = vsinq.f32.pop %v242
    %vm246 = vweird.f32 %v153
    %v247 = vand.u32 %v243, 3
    %vm248 = vcmp.lt.s32.totalorder %v247, 2
    %vm249 = vcmp.eq.s32.totalorder %v247, 0
    %v250 = vxor.u32 %v245, 2147483648
    %v251 = vsel %vm249, %v244, %v250
    %vm252 = vcmp.eq.s32.totalorder %v247, 2
    %v253 = vxor.u32 %v244, 2147483648
    %v254 = vsel %vm252, %v253, %v245
    %v255 = vsel %vm248, %v251, %v254
    %v256 = vsel %vm246, nan, %v255
    %v257 = vadd.f32 %v143, %v256
    %s258 = sld [smem:[#allocation3 + $0x2]]
    %v259 = vstv %s258
    %v260 = vmul.f32 %v28, %v259
    %s261 = sld [smem:[#allocation3 + $0x5]]
    %v262 = vstv %s261
    %v263 = vmul.f32 %v30, %v262
    %v264 = vadd.f32 %v260, %v263
    %s265 = sld [smem:[#allocation3 + $0x8]]
    %v266 = vstv %s265
    %v267 = vadd.f32 %v264, %v266
    %v268 = vand.u32 2147483647, %v267
    %vm269 = vcmp.le.f32.partialorder %v268, 0.7853982
    %vm270 = vcmp.lt.s32.totalorder %v267, 0
    %v271 = vand.u32 %v267, 2139095040
    %v272 = vshrl.u32 %v271, 23
    %v273 = vsub.s32 %v272, 127
    %v274 = vand.u32 2147483647, %v267
    %v275 = vand.u32 %v274, 8388607
    %v276 = vor.u32 %v275, 8388608
    %v277 = vsub.s32 0, %v276
    %v278 = vadd.s32 %v273, 1
    %vm279 = vcmp.gt.s32.totalorder %v278, 0
    %v280 = vsel %vm279, %v278, 0
    %v281 = vshrl.u32 %v280, 5
    %v282 = vand.u32 %v280, 31
    %v283 = vsub.s32 32, %v282
    %v284 = vshrl.u32 683565275, %v283
    %v285 = vshll.u32 683565275, %v282
    %v286 = vshrl.u32 2475754826, %v283
    %v287 = vor.u32 %v285, %v286
    %v288 = vshll.u32 2475754826, %v282
    %v289 = vshrl.u32 2131351028, %v283
    %v290 = vor.u32 %v288, %v289
    %v291 = vshll.u32 2131351028, %v282
    %v292 = vshrl.u32 2102212464, %v283
    %v293 = vor.u32 %v291, %v292
    %v294 = vshll.u32 2102212464, %v282
    %v295 = vshrl.u32 920167782, %v283
    %v296 = vor.u32 %v294, %v295
    %v297 = vshll.u32 920167782, %v282
    %v298 = vshrl.u32 1326507024, %v283
    %v299 = vor.u32 %v297, %v298
    %vm300 = vcmp.lt.s32.totalorder %v281, 1
    %vm301 = vcmp.lt.s32.totalorder %v281, 2
    %vm302 = vcmp.lt.s32.totalorder %v281, 3
    %vm303 = vcmp.lt.s32.totalorder %v281, 4
    %v304 = vsel %vm300, %v284, %v287
    %v305 = vsel %vm303, %v293, 2102212464
    %v306 = vsel %vm302, %v290, %v305
    %v307 = vsel %vm301, %v304, %v306
    %v308 = vsel %vm300, %v287, %v290
    %v309 = vsel %vm303, %v296, 920167782
    %v310 = vsel %vm302, %v293, %v309
    %v311 = vsel %vm301, %v308, %v310
    %v312 = vsel %vm300, %v290, %v293
    %v313 = vsel %vm303, %v299, 1326507024
    %v314 = vsel %vm302, %v296, %v313
    %v315 = vsel %vm301, %v312, %v314
    %v316 = vshll.u32 %v276, 8
    %v317 = vmul.u32.u64.compose %v316, %v315
    %v318 = vextract.low.u32 %v317
    %v319 = vextract.high.u32 %v317
    %v320 = vmul.u32.u64.compose %v316, %v311
    %v321 = vextract.low.u32 %v320
    %v322 = vextract.high.u32 %v320
    %v323 = vmul.u32 %v316, %v307
    %v324 = vadd.s32 %v319, %v321
    %vm325 = vc.u32 %v319, %v321
    %v326 = vadd.s32 %v322, 1
    %v327 = vsel %vm325, %v326, %v322
    %v328 = vadd.s32 %v323, %v327
    %v329 = vadd.s32 %v328, 536870912
    %v330 = vshrl.u32 %v329, 30
    %v331 = vshll.u32 %v330, 30
    %v332 = vsub.s32 %v328, %v331
    %vm333 = vcmp.lt.s32.totalorder %v332, 0
    %v334 = vsub.s32 0, %v332
    %v335 = vsel %vm333, %v334, %v332
    %v336 = vclz %v335
    %v337 = vsub.s32 %v336, 2
    %vm338 = vcmp.gt.s32.totalorder 0, %v337
    %v339 = vsel %vm338, 0, %v337
    %v340 = vsub.s32 32, %v339
    %v341 = vshll.u32 %v332, %v339
    %v342 = vshrl.u32 %v324, %v340
    %v343 = vor.u32 %v341, %v342
    %v344 = vsub.s32 4294967266, %v339
    %v345 = vadd.s32 %v344, 127
    %v346 = vshll.u32 %v345, 23
    %v347 = vor.u32 4788187, %v346
    %v348 = vand.u32 2147483647, %v347
    %v350 = vcvt.s32.f32 %v343
    %v351 = vmul.f32 %v350, %v348
    %v352 = vxor.u32 %v351, 2147483648
    %v353 = vsel %vm270, %v352, %v351
    %v354 = vsub.s32 4, %v330
    %v355 = vsel %vm270, %v354, %v330
    %v356 = vsel %vm269, %v267, %v353
    %v357 = vsel %vm269, 0, %v355
    %v358 = vcosq.f32.pop %v356
    %v359 = vsinq.f32.pop %v356
    %vm360 = vweird.f32 %v267
    %v361 = vand.u32 %v357, 3
    %vm362 = vcmp.lt.s32.totalorder %v361, 2
    %vm363 = vcmp.eq.s32.totalorder %v361, 0
    %v364 = vxor.u32 %v359, 2147483648
    %v365 = vsel %vm363, %v358, %v364
    %vm366 = vcmp.eq.s32.totalorder %v361, 2
    %v367 = vxor.u32 %v358, 2147483648
    %v368 = vsel %vm366, %v367, %v359
    %v369 = vsel %vm362, %v365, %v368
    %v370 = vsel %vm360, nan, %v369
    %v371 = vadd.f32 %v257, %v370
    %s372 = sld [smem:[#allocation3 + $0x9]]
    %v373 = vstv %s372
    %v374 = vmul.f32 %v371, %v373
    %s375 = sld [smem:[#allocation3 + $0xa]]
    %v376 = vstv %s375
    %v377 = vadd.f32 %v374, %v376
    %378 = vst [vmem:[#allocation7] sm:$0xff] %v377
    // Predicated region
    $region10: #{tpu_custom_call.1} parent=1 // pred_check
      _
    $region11: #{tpu_custom_call.1} parent=1 // pred_check_branch
      %380 = sbr.rel (0) target = $region13
    $region12: #{tpu_custom_call.1} parent=1 // pred_region
      %s382 = ssub.s32 128, 128
      %383 = vsyncadd [#allocation6], %s382
      %s385 = sshll.u32 [#allocation7], 4
      %s386 = int_to_ptr.vmem [resolvable:$true] %s385
      %388 = dma.vmem_to_hbm [thread:$0]  %s386, 128, %s2, [#allocation6]
    $region13: #{tpu_custom_call.1} parent=1 // pred_fallthru
      _
    // Predicated region
    $region14: #{tpu_custom_call.1} parent=1 // pred_check
      _
    $region15: #{tpu_custom_call.1} parent=1 // pred_check_branch
      %390 = sbr.rel (0) target = $region17
    $region16: #{tpu_custom_call.1} parent=1 // pred_region
      %391 = dma.done [#allocation6], 128
    $region17: #{tpu_custom_call.1} parent=1 // pred_fallthru
      _
    %392 = vsyncpa [#allocation5], 1
    %393 = vsyncpa [#allocation6], 1

</llo_original>
